<compile_context>
chip_gen: v6e
topology: v6e:2x2x1
jax: 0.10.0
libtpu: 0.0.40
codegen_flags: <defaults>
</compile_context>

<pallas_src>
import math
from functools import partial

import jax
import jax.numpy as jnp
from jax.experimental import pallas as pl
from jax.experimental.pallas import tpu as pltpu

_LN_EPS = 1e-5
_INV_SQRT2 = 1.0 / math.sqrt(2.0)


def _resblock_kernel(x_ref, p_ref, b1_ref, w1_ref, w2_ref, o_ref,
                     xn_ref, acc_ref, *, approximate_gelu):
    j = pl.program_id(1)

    # --- First hidden block for this row tile: LayerNorm + init accumulator ---
    @pl.when(j == 0)
    def _():
        x = x_ref[...].astype(jnp.float32)
        mu = jnp.mean(x, axis=-1, keepdims=True)
        # One-pass variance; clamp tiny negative round-off before rsqrt.
        var = jnp.maximum(jnp.mean(x * x, axis=-1, keepdims=True) - mu * mu, 0.0)
        xn_ref[...] = ((x - mu) * jax.lax.rsqrt(var + _LN_EPS)
                       * p_ref[0:1, :] + p_ref[1:2, :])        # gamma, beta
        acc_ref[...] = jnp.zeros_like(acc_ref)

    # --- Linear 1 (columns jb) + GELU + Linear 2 (rows jb), f32 accumulation ---
    h = jnp.dot(xn_ref[...].astype(jnp.bfloat16), w1_ref[...],
                preferred_element_type=jnp.float32) + b1_ref[...]
    if approximate_gelu:
        h = jax.nn.gelu(h, approximate=True)          # tanh form -> EUP slot
    else:
        h = 0.5 * h * (1.0 + jax.lax.erf(h * _INV_SQRT2))  # exact nn.GELU default
    acc_ref[...] += jnp.dot(h.astype(jnp.bfloat16), w2_ref[...],
                            preferred_element_type=jnp.float32)

    # --- Last hidden block: add b2 and residual, emit output tile ---
    @pl.when(j == pl.num_programs(1) - 1)
    def _():
        o_ref[...] = (xn_ref[...] + acc_ref[...] + p_ref[2:3, :]).astype(o_ref.dtype)


def _vmem_budget_bytes():
    """Per-core VMEM budget with headroom for Mosaic internal scratch / spills."""
    cap = None
    try:
        cap = int(getattr(pltpu.get_tpu_info(), "vmem_capacity_bytes"))
    except Exception:
        cap = None
    if not cap or cap <= 0:
        kind = ""
        try:
            kind = jax.devices()[0].device_kind.lower()
        except Exception:
            pass
        if any(t in kind for t in ("v5 lite", "v5e", "v5litepod", "v6", "trillium", "v4")):
            cap = 128 << 20          # v4/v5e/v6e: 128 MiB physical VMEM
        elif any(t in kind for t in ("v2", "v3")):
            cap = 32 << 20
        else:
            cap = 64 << 20           # conservative default (v7x: 64 MiB per TC)
    return int(min(cap * 0.85, cap - (10 << 20)))   # ~54 MiB on v7x, ~108 MiB on v6e


def _select_tiles(N, C, in_itemsize, out_itemsize, budget):
    """Pick (row_tile, hidden_tile) that fit the per-core VMEM budget."""
    # Hidden axis: keep both (C, C) bf16 weights resident if they fit comfortably,
    # otherwise stream (C, ht)/(ht, C) blocks (double-buffered) over the hidden dim.
    resident = 2 * C * C * 2
    if resident <= max(budget // 2, budget - (32 << 20)):
        hidden_tile = C
        weight_bytes = resident                              # single-buffered
    else:
        hidden_tile = None
        for ht in (2048, 1024, 512, 256, 128):
            if C % ht == 0 and 8 * C * ht <= int(0.4 * budget):   # 2 bufs x 2 weights x bf16
                hidden_tile = ht
                break
        if hidden_tile is None:
            # TODO(synk): no 128-multiple divisor of C fits; fall back to resident weights.
            hidden_tile = C
        weight_bytes = resident if hidden_tile == C else 8 * C * hidden_tile

    # Row axis: double-buffered x/out tiles + two f32 scratches + f32 temporaries.
    per_row = 2 * C * in_itemsize + 2 * C * out_itemsize + 2 * C * 4 + 3 * C * 4
    row_budget = budget - weight_bytes - 10 * C * 4 - (4 << 20)
    max_rows = max(8, row_budget // per_row)
    row_tile = 8
    for cand in (1024, 512, 256, 128, 64, 32, 16, 8):
        if cand <= max_rows:
            row_tile = cand
            break
    row_tile = min(row_tile, ((max(N, 1) + 7) // 8) * 8)     # don't exceed the problem
    row_tile = max(8, (row_tile // 8) * 8)
    return row_tile, hidden_tile


def simple_res_block(x, gamma, beta, w1, b1, w2, b2, *,
                     row_tile=None, hidden_tile=None, approximate_gelu=False):
    """SimpleResBlock forward: y = LN(x) + W2.gelu(W1.LN(x) + b1) + b2.

    x: (B, S, C).  w1/w2: (C, C) stored as (in, out) — the transpose of nn.Linear's
    (out, in) weight.  gamma/beta/b1/b2: (C,).  Output dtype follows x.dtype, so
    passing bf16 x gives bf16 I/O (halved HBM traffic) while LN stats, GELU and
    matmul accumulation stay in f32.  Pre-cast weights to bf16 / jit the caller to
    avoid a per-call cast.
    """
    B, S, C = x.shape
    N = B * S
    x2 = x.reshape(N, C)

    budget = _vmem_budget_bytes()
    auto_rt, auto_ht = _select_tiles(N, C, x.dtype.itemsize, x.dtype.itemsize, budget)
    if row_tile is None:
        row_tile = auto_rt
    row_tile = max(8, (int(row_tile) // 8) * 8)
    if hidden_tile is None:
        hidden_tile = auto_ht
    hidden_tile = int(hidden_tile)
    if C % hidden_tile != 0 or (hidden_tile != C and hidden_tile % 128 != 0):
        hidden_tile = C                                       # safe fallback
    n_hid = C // hidden_tile
    weights_resident = (n_hid == 1)

    # Pad rows so the grid covers N exactly (padded rows sliced off below).
    n_tiles = (N + row_tile - 1) // row_tile
    N_pad = n_tiles * row_tile
    if N_pad != N:
        x2 = jnp.pad(x2, ((0, N_pad - N), (0, 0)))

    # Fused per-channel params: rows 0..2 = gamma, beta, b2 (f32), padded to 8 sublanes.
    pfused = jnp.concatenate(
        [gamma.reshape(1, C), beta.reshape(1, C), b2.reshape(1, C),
         jnp.zeros((5, C), jnp.float32)], axis=0).astype(jnp.float32)
    b1_2 = b1.reshape(1, C).astype(jnp.float32)
    w1_bf = w1 if w1.dtype == jnp.bfloat16 else w1.astype(jnp.bfloat16)
    w2_bf = w2 if w2.dtype == jnp.bfloat16 else w2.astype(jnp.bfloat16)

    def _spec(shape, index_map, resident):
        if resident:
            return pl.BlockSpec(shape, index_map, pipeline_mode=pl.Buffered(1))
        return pl.BlockSpec(shape, index_map)

    # Realistic VMEM request: single-buffered resident weights (not doubled),
    # double-buffered streaming blocks / io tiles, actual scratch + temp sizes.
    nbuf_w = 1 if weights_resident else 2
    usage = (nbuf_w * 2 * C * hidden_tile * 2                 # W1/W2 blocks (bf16)
             + 8 * C * 4 + nbuf_w * 8 * hidden_tile * 4       # fused params + b1 (padded)
             + 2 * row_tile * C * x.dtype.itemsize * 2        # x + out, double-buffered
             + 2 * row_tile * C * 4                           # xn + acc scratch (f32)
             + 3 * row_tile * max(C, hidden_tile) * 4)        # live f32 temporaries
    vmem_limit = int(max(16 << 20, min(budget, usage + (8 << 20))))

    kernel = partial(_resblock_kernel, approximate_gelu=approximate_gelu)

    out = pl.pallas_call(
        kernel,
        out_shape=jax.ShapeDtypeStruct((N_pad, C), x.dtype),
        grid_spec=pltpu.PrefetchScalarGridSpec(
            num_scalar_prefetch=0,
            grid=(n_tiles, n_hid),
            in_specs=[
                pl.BlockSpec((row_tile, C), lambda i, j: (i, 0)),              # x rows
                _spec((8, C), lambda i, j: (0, 0), True),                      # gamma/beta/b2
                _spec((1, hidden_tile), lambda i, j: (0, j), weights_resident),  # b1 block
                _spec((C, hidden_tile), lambda i, j: (0, j), weights_resident),  # W1 (in, out)
                _spec((hidden_tile, C), lambda i, j: (j, 0), weights_resident),  # W2 (in, out)
            ],
            out_specs=pl.BlockSpec((row_tile, C), lambda i, j: (i, 0)),
            scratch_shapes=[
                pltpu.VMEM((row_tile, C), jnp.float32),   # xn (LN output, reused)
                pltpu.VMEM((row_tile, C), jnp.float32),   # second-matmul accumulator
            ],
        ),
        compiler_params=pltpu.CompilerParams(
            dimension_semantics=("parallel", "arbitrary"),
            vmem_limit_bytes=vmem_limit,
        ),
    )(x2, pfused, b1_2, w1_bf, w2_bf)

    if N_pad != N:
        out = out[:N]
    return out.reshape(B, S, C)


def _reference(x, gamma, beta, w1, b1, w2, b2):
    # Pure-JAX reference mirroring the kernel's precision contract:
    # f32 LayerNorm / bias / GELU / residual, bf16 matmul inputs, f32 accumulation.
    xf = x.astype(jnp.float32)
    mu = xf.mean(-1, keepdims=True)
    var = ((xf - mu) ** 2).mean(-1, keepdims=True)
    xn = (xf - mu) * jax.lax.rsqrt(var + _LN_EPS) * gamma + beta
    h = jnp.dot(xn.astype(jnp.bfloat16), w1.astype(jnp.bfloat16),
                preferred_element_type=jnp.float32) + b1
    h = 0.5 * h * (1.0 + jax.lax.erf(h * _INV_SQRT2))
    y = jnp.dot(h.astype(jnp.bfloat16), w2.astype(jnp.bfloat16),
                preferred_element_type=jnp.float32) + b2
    return xn + y


if __name__ == "__main__":
    key = jax.random.PRNGKey(0)
    B, S, C = 2, 8, 256  # small shapes; C=256 so the streamed hidden-block path is legal

    k_x, k_g, k_be, k_w1, k_b1, k_w2, k_b2 = jax.random.split(key, 7)
    x = jax.random.normal(k_x, (B, S, C), dtype=jnp.float32)

    # LayerNorm params (perturbed from the PyTorch default init to exercise both).
    gamma = 1.0 + 0.1 * jax.random.normal(k_g, (C,), jnp.float32)
    beta = 0.1 * jax.random.normal(k_be, (C,), jnp.float32)

    # nn.Linear stores weight as (out, in); pass the (in, out) transpose so that
    # y = x @ W.T + b is computed exactly.
    bound = 1.0 / math.sqrt(C)
    W1_oi = jax.random.uniform(k_w1, (C, C), jnp.float32, -bound, bound)
    b1 = jax.random.uniform(k_b1, (C,), jnp.float32, -bound, bound)
    W2_oi = jax.random.uniform(k_w2, (C, C), jnp.float32, -bound, bound)
    b2 = jax.random.uniform(k_b2, (C,), jnp.float32, -bound, bound)
    w1 = W1_oi.T  # (in, out)
    w2 = W2_oi.T  # (in, out)

    ref = _reference(x, gamma, beta, w1, b1, w2, b2)

    # 1) Streamed-weight path: 2 row tiles x 2 hidden blocks (exercises the
    #    accumulator / bias-block / multi-step pipeline machinery at small scale).
    out_stream = simple_res_block(x, gamma, beta, w1, b1, w2, b2,
                                  row_tile=8, hidden_tile=128)
    out_stream = jax.block_until_ready(out_stream)
    assert out_stream.shape == (B, S, C)
    assert jnp.allclose(out_stream, ref, atol=2e-3, rtol=2e-3), "streamed path mismatch"

    # 2) Auto-configured path: generation-aware budget, weights VMEM-resident.
    out_auto = simple_res_block(x, gamma, beta, w1, b1, w2, b2)
    out_auto = jax.block_until_ready(out_auto)
    assert out_auto.shape == (B, S, C)
    assert jnp.allclose(out_auto, ref, atol=2e-3, rtol=2e-3), "auto path mismatch"

    print("KERNEL_OK")
</pallas_src>

<mosaic_0001>
module attributes {stable_mosaic.version = 11 : i64} {
  func.func @_resblock_kernel(%arg0: i32, %arg1: i32, %arg2: memref<8x256xf32, #tpu.memory_space<vmem>>, %arg3: memref<8x256xf32, #tpu.memory_space<vmem>>, %arg4: memref<1x128xf32, #tpu.memory_space<vmem>>, %arg5: memref<256x128xbf16, #tpu.memory_space<vmem>>, %arg6: memref<128x256xbf16, #tpu.memory_space<vmem>>, %arg7: memref<8x256xf32, #tpu.memory_space<vmem>>, %arg8: memref<8x256xf32, #tpu.memory_space<vmem>>, %arg9: memref<8x256xf32, #tpu.memory_space<vmem>>) attributes {dimension_semantics = [#tpu.dimension_semantics<parallel>, #tpu.dimension_semantics<arbitrary>], iteration_bounds = array<i64: 2, 2>, scalar_prefetch = 0 : i64, scratch_operands = 2 : i64, tpu.core_type = #tpu.core_type<tc>, window_params = [{transform_indices = @transform_0, window_bounds = array<i64: 8, 256>}, {pipeline_mode = #tpu.pipeline_mode<synchronous>, transform_indices = @transform_1, window_bounds = array<i64: 8, 256>}, {transform_indices = @transform_2, window_bounds = array<i64: 1, 128>}, {transform_indices = @transform_3, window_bounds = array<i64: 256, 128>}, {transform_indices = @transform_4, window_bounds = array<i64: 128, 256>}, {transform_indices = @transform_5, window_bounds = array<i64: 8, 256>}]} {
    %c0_i32 = arith.constant 0 : i32
    %0 = arith.cmpi eq, %arg1, %c0_i32 : i32
    %1 = arith.extui %0 : i1 to i32
    %c0_i32_0 = arith.constant 0 : i32
    %2 = arith.cmpi ne, %1, %c0_i32_0 : i32
    scf.if %2 {
      %c0_17 = arith.constant 0 : index
      %c0_18 = arith.constant 0 : index
      %27 = vector.load %arg2[%c0_17, %c0_18] : memref<8x256xf32, #tpu.memory_space<vmem>>, vector<8x256xf32>
      %cst_19 = arith.constant dense<0.000000e+00> : vector<8xf32>
      %28 = vector.multi_reduction <add>, %27, %cst_19 [1] : vector<8x256xf32> to vector<8xf32>
      %29 = vector.shape_cast %28 : vector<8xf32> to vector<8x1xf32>
      %cst_20 = arith.constant 2.560000e+02 : f32
      %30 = vector.broadcast %cst_20 : f32 to vector<8x1xf32>
      %31 = arith.divf %29, %30 : vector<8x1xf32>
      %32 = arith.mulf %27, %27 : vector<8x256xf32>
      %cst_21 = arith.constant dense<0.000000e+00> : vector<8xf32>
      %33 = vector.multi_reduction <add>, %32, %cst_21 [1] : vector<8x256xf32> to vector<8xf32>
      %34 = vector.shape_cast %33 : vector<8xf32> to vector<8x1xf32>
      %cst_22 = arith.constant 2.560000e+02 : f32
      %35 = vector.broadcast %cst_22 : f32 to vector<8x1xf32>
      %36 = arith.divf %34, %35 : vector<8x1xf32>
      %37 = arith.mulf %31, %31 : vector<8x1xf32>
      %38 = arith.subf %36, %37 : vector<8x1xf32>
      %cst_23 = arith.constant 0.000000e+00 : f32
      %39 = vector.broadcast %cst_23 : f32 to vector<8x1xf32>
      %40 = arith.maximumf %38, %39 : vector<8x1xf32>
      %41 = vector.broadcast %31 : vector<8x1xf32> to vector<8x256xf32>
      %42 = arith.subf %27, %41 : vector<8x256xf32>
      %cst_24 = arith.constant 9.99999974E-6 : f32
      %43 = vector.broadcast %cst_24 : f32 to vector<8x1xf32>
      %44 = arith.addf %40, %43 : vector<8x1xf32>
      %45 = math.rsqrt %44 : vector<8x1xf32>
      %46 = vector.broadcast %45 : vector<8x1xf32> to vector<8x256xf32>
      %47 = arith.mulf %42, %46 : vector<8x256xf32>
      %c0_25 = arith.constant 0 : index
      %c0_26 = arith.constant 0 : index
      %48 = vector.load %arg3[%c0_25, %c0_26] : memref<8x256xf32, #tpu.memory_space<vmem>>, vector<1x256xf32>
      %49 = vector.broadcast %48 : vector<1x256xf32> to vector<8x256xf32>
      %50 = arith.mulf %47, %49 : vector<8x256xf32>
      %c1 = arith.constant 1 : index
      %c0_27 = arith.constant 0 : index
      %51 = vector.load %arg3[%c1, %c0_27] : memref<8x256xf32, #tpu.memory_space<vmem>>, vector<1x256xf32>
      %52 = vector.broadcast %51 : vector<1x256xf32> to vector<8x256xf32>
      %53 = arith.addf %50, %52 : vector<8x256xf32>
      %c0_28 = arith.constant 0 : index
      %c0_29 = arith.constant 0 : index
      %54 = vector.load %arg8[%c0_28, %c0_29] : memref<8x256xf32, #tpu.memory_space<vmem>>, vector<8x256xf32>
      tpu.vector_store %arg8[%c0_28, %c0_29], %53 {strides = array<i32>} : memref<8x256xf32, #tpu.memory_space<vmem>>, vector<8x256xf32>,
      %cst_30 = arith.constant 0.000000e+00 : f32
      %55 = vector.broadcast %cst_30 : f32 to vector<8x256xf32>
      %c0_31 = arith.constant 0 : index
      %c0_32 = arith.constant 0 : index
      %56 = vector.load %arg9[%c0_31, %c0_32] : memref<8x256xf32, #tpu.memory_space<vmem>>, vector<8x256xf32>
      tpu.vector_store %arg9[%c0_31, %c0_32], %55 {strides = array<i32>} : memref<8x256xf32, #tpu.memory_space<vmem>>, vector<8x256xf32>,
    } else {
    }
    %c0 = arith.constant 0 : index
    %c0_1 = arith.constant 0 : index
    %3 = vector.load %arg8[%c0, %c0_1] : memref<8x256xf32, #tpu.memory_space<vmem>>, vector<8x256xf32>
    %4 = arith.truncf %3 : vector<8x256xf32> to vector<8x256xbf16>
    %c0_2 = arith.constant 0 : index
    %c0_3 = arith.constant 0 : index
    %5 = vector.load %arg5[%c0_2, %c0_3] : memref<256x128xbf16, #tpu.memory_space<vmem>>, vector<256x128xbf16>
    %cst = arith.constant dense<0.000000e+00> : vector<8x128xf32>
    %6 = tpu.matmul %4, %5, %cst {dimension_numbers = #tpu.dot_dimension_numbers<[1], [0], [0], [1], [0, 0, 1, 1], [], []>} : vector<8x256xbf16>, vector<256x128xbf16>, vector<8x128xf32> -> vector<8x128xf32>
    %c0_4 = arith.constant 0 : index
    %c0_5 = arith.constant 0 : index
    %7 = vector.load %arg4[%c0_4, %c0_5] : memref<1x128xf32, #tpu.memory_space<vmem>>, vector<1x128xf32>
    %8 = vector.broadcast %7 : vector<1x128xf32> to vector<8x128xf32>
    %9 = arith.addf %6, %8 : vector<8x128xf32>
    %cst_6 = arith.constant 5.000000e-01 : f32
    %10 = vector.broadcast %cst_6 : f32 to vector<8x128xf32>
    %11 = arith.mulf %10, %9 : vector<8x128xf32>
    %cst_7 = arith.constant 0.707106769 : f32
    %12 = vector.broadcast %cst_7 : f32 to vector<8x128xf32>
    %13 = arith.mulf %9, %12 : vector<8x128xf32>
    %14 = math.erf %13 : vector<8x128xf32>
    %cst_8 = arith.constant 1.000000e+00 : f32
    %15 = vector.broadcast %cst_8 : f32 to vector<8x128xf32>
    %16 = arith.addf %15, %14 : vector<8x128xf32>
    %17 = arith.mulf %11, %16 : vector<8x128xf32>
    %c0_9 = arith.constant 0 : index
    %c0_10 = arith.constant 0 : index
    %18 = vector.load %arg9[%c0_9, %c0_10] : memref<8x256xf32, #tpu.memory_space<vmem>>, vector<8x256xf32>
    %19 = arith.truncf %17 : vector<8x128xf32> to vector<8x128xbf16>
    %c0_11 = arith.constant 0 : index
    %c0_12 = arith.constant 0 : index
    %20 = vector.load %arg6[%c0_11, %c0_12] : memref<128x256xbf16, #tpu.memory_space<vmem>>, vector<128x256xbf16>
    %cst_13 = arith.constant dense<0.000000e+00> : vector<8x256xf32>
    %21 = tpu.matmul %19, %20, %cst_13 {dimension_numbers = #tpu.dot_dimension_numbers<[1], [0], [0], [1], [0, 0, 1, 1], [], []>} : vector<8x128xbf16>, vector<128x256xbf16>, vector<8x256xf32> -> vector<8x256xf32>
    %22 = arith.addf %18, %21 : vector<8x256xf32>
    %c0_14 = arith.constant 0 : index
    %c0_15 = arith.constant 0 : index
    %23 = vector.load %arg9[%c0_14, %c0_15] : memref<8x256xf32, #tpu.memory_space<vmem>>, vector<8x256xf32>
    tpu.vector_store %arg9[%c0_14, %c0_15], %22 {strides = array<i32>} : memref<8x256xf32, #tpu.memory_space<vmem>>, vector<8x256xf32>,
    %c1_i32 = arith.constant 1 : i32
    %24 = arith.cmpi eq, %arg1, %c1_i32 : i32
    %25 = arith.extui %24 : i1 to i32
    %c0_i32_16 = arith.constant 0 : i32
    %26 = arith.cmpi ne, %25, %c0_i32_16 : i32
    scf.if %26 {
      %c0_17 = arith.constant 0 : index
      %c0_18 = arith.constant 0 : index
      %27 = vector.load %arg8[%c0_17, %c0_18] : memref<8x256xf32, #tpu.memory_space<vmem>>, vector<8x256xf32>
      %c0_19 = arith.constant 0 : index
      %c0_20 = arith.constant 0 : index
      %28 = vector.load %arg9[%c0_19, %c0_20] : memref<8x256xf32, #tpu.memory_space<vmem>>, vector<8x256xf32>
      %29 = arith.addf %27, %28 : vector<8x256xf32>
      %c2 = arith.constant 2 : index
      %c0_21 = arith.constant 0 : index
      %30 = vector.load %arg3[%c2, %c0_21] : memref<8x256xf32, #tpu.memory_space<vmem>>, vector<1x256xf32>
      %31 = vector.broadcast %30 : vector<1x256xf32> to vector<8x256xf32>
      %32 = arith.addf %29, %31 : vector<8x256xf32>
      %c0_22 = arith.constant 0 : index
      %c0_23 = arith.constant 0 : index
      %33 = vector.load %arg7[%c0_22, %c0_23] : memref<8x256xf32, #tpu.memory_space<vmem>>, vector<8x256xf32>
      tpu.vector_store %arg7[%c0_22, %c0_23], %32 {strides = array<i32>} : memref<8x256xf32, #tpu.memory_space<vmem>>, vector<8x256xf32>,
    } else {
    }
    return
  }
  func.func @transform_0(%arg0: i32, %arg1: i32) -> (i32, i32) {
    %c0_i32 = arith.constant 0 : i32
    %c0_i32_0 = arith.constant 0 : i32
    return %arg0, %c0_i32 : i32, i32
  }
  func.func @transform_1(%arg0: i32, %arg1: i32) -> (i32, i32) {
    %c0_i32 = arith.constant 0 : i32
    %c0_i32_0 = arith.constant 0 : i32
    %c0_i32_1 = arith.constant 0 : i32
    return %c0_i32, %c0_i32_0 : i32, i32
  }
  func.func @transform_2(%arg0: i32, %arg1: i32) -> (i32, i32) {
    %c0_i32 = arith.constant 0 : i32
    %c0_i32_0 = arith.constant 0 : i32
    return %c0_i32, %arg1 : i32, i32
  }
  func.func @transform_3(%arg0: i32, %arg1: i32) -> (i32, i32) {
    %c0_i32 = arith.constant 0 : i32
    %c0_i32_0 = arith.constant 0 : i32
    return %c0_i32, %arg1 : i32, i32
  }
  func.func @transform_4(%arg0: i32, %arg1: i32) -> (i32, i32) {
    %c0_i32 = arith.constant 0 : i32
    %c0_i32_0 = arith.constant 0 : i32
    return %arg1, %c0_i32 : i32, i32
  }
  func.func @transform_5(%arg0: i32, %arg1: i32) -> (i32, i32) {
    %c0_i32 = arith.constant 0 : i32
    %c0_i32_0 = arith.constant 0 : i32
    return %arg0, %c0_i32 : i32, i32
  }
}

</mosaic_0001>

<llo_original>
// kernel: tpu_custom_call.1
$region0: #{tpu_custom_call.1}
  #allocation0 [shape = 'u32[]', space=smem, size = 0x4, offset = 0x4, fixed_abs, tag = 'smem constant byte address 0x4 - core index']
  #allocation1 [shape = 'u32[144,128]{1,0:T(1,128)}', space=vmem, size = 0x12000, scoped, tag = 'internal scratch']
  #allocation2 [shape = 'f32[8,256]{1,0:T(8,128)}', space=vmem, size = 0x2000, scoped, tag = 'scratch operand']
  #allocation3 [shape = 'f32[8,256]{1,0:T(8,128)}', space=vmem, size = 0x2000, scoped, tag = 'scratch operand']
  %s0 = inlined_call_operand.hbm [shape: f32[16,256], index: 0, kind: input, shape index: {}]
  %s1 = inlined_call_operand.hbm [shape: f32[8,256], index: 1, kind: input, shape index: {}]
  %s2 = inlined_call_operand.vmem [shape: f32[1,256], index: 2, kind: input, shape index: {}]
  %s3 = inlined_call_operand.hbm [shape: bf16[256,256], index: 3, kind: input, shape index: {}]
  %s4 = inlined_call_operand.hbm [shape: bf16[256,256], index: 4, kind: input, shape index: {}]
  %s5 = inlined_call_operand.hbm [shape: f32[16,256], index: 5, kind: output, shape index: {}]
  %s6 = sld [smem:[#allocation0]]
  $region77: #{tpu_custom_call.1} parent=0
    _
  %s8 = ssub.s32 1, %s6
  %s9 = scalar_select 0, %s8, %s6
  $region1: #{tpu_custom_call.1} parent=0
    #allocation4 [shape = 'u8[16384]{0}', space=vmem, size = 0x4000, scoped, tag = 'input window, operand 0']
    #allocation5 [shape = 's32[2]{0}', space=sflag, size = 0x8, scoped, tag = 'scoped memory for tpu_custom_call.1']
    #allocation6 [shape = 's32[2]{0}', space=sflag, size = 0x8, scoped, tag = 'scoped memory for tpu_custom_call.1']
    #allocation7 [shape = 'u8[8192]{0}', space=vmem, size = 0x2000, scoped, tag = 'input window, operand 1, single buffered']
    #allocation8 [shape = 's32[1]{0}', space=sflag, size = 0x4, scoped, tag = 'scoped memory for tpu_custom_call.1']
    #allocation9 [shape = 'u8[131072]{0}', space=vmem, size = 0x20000, scoped, tag = 'input window, operand 3']
    #allocation10 [shape = 'u8[131072]{0}', space=vmem, size = 0x20000, scoped, tag = 'input window, operand 4']
    #allocation11 [shape = 'u8[16384]{0}', space=vmem, size = 0x4000, scoped, tag = 'output window, operand 0']
    %10 = vsyncpa [#allocation5], 0
    %s11 = scalar_lea.sflag [#allocation5], 1
    %12 = vsyncpa %s11, 0
    %13 = vsyncpa [#allocation8], 0
    %14 = vsyncpa [#allocation6], 0
    %s15 = scalar_lea.sflag [#allocation6], 1
    %16 = vsyncpa %s15, 0
    loop: start=0, step=1, limit=6
    $region2: #{tpu_custom_call.1} parent=1 // loop_pre_header
      _
    $region3: #{tpu_custom_call.1} parent=1 // loop_header
      %s18 = sphi 0, %s22
      %p19 = scmp.ge.s32.totalorder %s18, 6
      %s25 = sphi 0, %s37
      %s26 = sphi 0, %s33
      %s27 = sphi 0, %s25
      %s28 = sphi 0, %s26
      %s29 = sphi 0, %s27
      %s30 = sphi 0, %s28
      %s40 = sphi 0, %s42
      %s43 = sphi 0, %s40
      %s44 = sphi 0, %s43
      %s60 = sphi 0, %s44
      %s64 = sphi 0, %s64
      %s66 = sphi 0, %s64
      %s67 = sphi 0, %s66
      %s81 = sphi 0, %s67
      %s87 = sphi 0, %s89
      %s90 = sphi 0, %s87
      %s91 = sphi 0, %s90
      %s107 = sphi 0, %s91
      %s113 = sphi 0, %s115
      %s116 = sphi 0, %s113
      %s117 = sphi 0, %s116
      %s133 = sphi 0, %s117
      %s139 = sphi 0, %s141
      %s142 = sphi 0, %s139
      %s143 = sphi 0, %s142
      %s159 = sphi 0, %s143
      %s165 = sphi 0, %s167
      %s168 = sphi 0, %s165
      %s169 = sphi 0, %s168
      %s185 = sphi 0, %s169
    $region4: #{tpu_custom_call.1} parent=1 // loop_header_branch
      %21 = sbr.rel (%p19) target = $region8
    $region5: #{tpu_custom_call.1} parent=1 // loop_body
      %s23 = ssub.s32 %s18, 1
      %s24 = ssub.s32 %s18, 2
      %s31 = sadd.s32 1, %s26
      %p32 = scmp.ge.s32.totalorder %s31, 2
      %s33 = scalar_select %p32, 0, %s31
      %s34 = sadd.s32 1, %s25
      %s35 = scalar_select %p32, %s34, %s25
      %p36 = scmp.ge.s32.totalorder %s35, 2
      %s37 = scalar_select %p36, 0, %s35
      %s38 = ssub.s32 %s25, %s37
      %p39 = scmp.eq.s32.totalorder %s38, 0
      %s41 = sadd.s32 %s40, 1
      %s42 = scalar_select %p39, %s40, %s41
      %p45 = pneg %p39
      %p46 = scmp.eq.s32.totalorder %s18, 3
      %p47 = por %p45, %p46
      %p48 = scmp.ne.s32.totalorder %s40, %s43
      %p49 = scmp.eq.s32.totalorder %s18, 0
      %p50 = por %p48, %p49
      %p51 = scmp.ne.s32.totalorder %s40, %s43
      %p52 = scmp.eq.s32.totalorder %s23, 3
      %p53 = por %p51, %p52
      %p54 = scmp.ne.s32.totalorder %s43, %s44
      %p55 = scmp.eq.s32.totalorder %s23, 0
      %p56 = por %p54, %p55
      %p57 = scmp.ne.s32.totalorder %s43, %s44
      %p58 = scmp.eq.s32.totalorder %s24, 3
      %p59 = por %p57, %p58
      %p61 = scmp.ne.s32.totalorder %s44, %s60
      %p62 = scmp.eq.s32.totalorder %s24, 0
      %p63 = por %p61, %p62
      %s65 = sadd.s32 %s64, 1
      %p68 = scmp.eq.s32.totalorder %s18, 3
      %p69 = scmp.ne.s32.totalorder %s64, %s66
      %p70 = scmp.eq.s32.totalorder %s18, 0
      %p71 = por %p69, %p70
      %p72 = scmp.ne.s32.totalorder %s64, %s66
      %p73 = scmp.eq.s32.totalorder %s23, 3
      %p74 = por %p72, %p73
      %p75 = scmp.ne.s32.totalorder %s66, %s67
      %p76 = scmp.eq.s32.totalorder %s23, 0
      %p77 = por %p75, %p76
      %p78 = scmp.ne.s32.totalorder %s66, %s67
      %p79 = scmp.eq.s32.totalorder %s24, 3
      %p80 = por %p78, %p79
      %p82 = scmp.ne.s32.totalorder %s67, %s81
      %p83 = scmp.eq.s32.totalorder %s24, 0
      %p84 = por %p82, %p83
      %s85 = ssub.s32 %s26, %s33
      %p86 = scmp.eq.s32.totalorder %s85, 0
      %s88 = sadd.s32 %s87, 1
      %s89 = scalar_select %p86, %s87, %s88
      %p92 = pneg %p86
      %p93 = scmp.eq.s32.totalorder %s18, 3
      %p94 = por %p92, %p93
      %p95 = scmp.ne.s32.totalorder %s87, %s90
      %p96 = scmp.eq.s32.totalorder %s18, 0
      %p97 = por %p95, %p96
      %p98 = scmp.ne.s32.totalorder %s87, %s90
      %p99 = scmp.eq.s32.totalorder %s23, 3
      %p100 = por %p98, %p99
      %p101 = scmp.ne.s32.totalorder %s90, %s91
      %p102 = scmp.eq.s32.totalorder %s23, 0
      %p103 = por %p101, %p102
      %p104 = scmp.ne.s32.totalorder %s90, %s91
      %p105 = scmp.eq.s32.totalorder %s24, 3
      %p106 = por %p104, %p105
      %p108 = scmp.ne.s32.totalorder %s91, %s107
      %p109 = scmp.eq.s32.totalorder %s24, 0
      %p110 = por %p108, %p109
      %s111 = ssub.s32 %s26, %s33
      %p112 = scmp.eq.s32.totalorder %s111, 0
      %s114 = sadd.s32 %s113, 1
      %s115 = scalar_select %p112, %s113, %s114
      %p118 = pneg %p112
      %p119 = scmp.eq.s32.totalorder %s18, 3
      %p120 = por %p118, %p119
      %p121 = scmp.ne.s32.totalorder %s113, %s116
      %p122 = scmp.eq.s32.totalorder %s18, 0
      %p123 = por %p121, %p122
      %p124 = scmp.ne.s32.totalorder %s113, %s116
      %p125 = scmp.eq.s32.totalorder %s23, 3
      %p126 = por %p124, %p125
      %p127 = scmp.ne.s32.totalorder %s116, %s117
      %p128 = scmp.eq.s32.totalorder %s23, 0
      %p129 = por %p127, %p128
      %p130 = scmp.ne.s32.totalorder %s116, %s117
      %p131 = scmp.eq.s32.totalorder %s24, 3
      %p132 = por %p130, %p131
      %p134 = scmp.ne.s32.totalorder %s117, %s133
      %p135 = scmp.eq.s32.totalorder %s24, 0
      %p136 = por %p134, %p135
      %s137 = ssub.s32 %s26, %s33
      %p138 = scmp.eq.s32.totalorder %s137, 0
      %s140 = sadd.s32 %s139, 1
      %s141 = scalar_select %p138, %s139, %s140
      %p144 = pneg %p138
      %p145 = scmp.eq.s32.totalorder %s18, 3
      %p146 = por %p144, %p145
      %p147 = scmp.ne.s32.totalorder %s139, %s142
      %p148 = scmp.eq.s32.totalorder %s18, 0
      %p149 = por %p147, %p148
      %p150 = scmp.ne.s32.totalorder %s139, %s142
      %p151 = scmp.eq.s32.totalorder %s23, 3
      %p152 = por %p150, %p151
      %p153 = scmp.ne.s32.totalorder %s142, %s143
      %p154 = scmp.eq.s32.totalorder %s23, 0
      %p155 = por %p153, %p154
      %p156 = scmp.ne.s32.totalorder %s142, %s143
      %p157 = scmp.eq.s32.totalorder %s24, 3
      %p158 = por %p156, %p157
      %p160 = scmp.ne.s32.totalorder %s143, %s159
      %p161 = scmp.eq.s32.totalorder %s24, 0
      %p162 = por %p160, %p161
      %s163 = ssub.s32 %s25, %s37
      %p164 = scmp.eq.s32.totalorder %s163, 0
      %s166 = sadd.s32 %s165, 1
      %s167 = scalar_select %p164, %s165, %s166
      %p170 = pneg %p164
      %p171 = scmp.eq.s32.totalorder %s18, 3
      %p172 = por %p170, %p171
      %p173 = scmp.ne.s32.totalorder %s165, %s168
      %p174 = scmp.eq.s32.totalorder %s18, 0
      %p175 = por %p173, %p174
      %p176 = scmp.ne.s32.totalorder %s165, %s168
      %p177 = scmp.eq.s32.totalorder %s23, 3
      %p178 = por %p176, %p177
      %p179 = scmp.ne.s32.totalorder %s168, %s169
      %p180 = scmp.eq.s32.totalorder %s23, 0
      %p181 = por %p179, %p180
      %p182 = scmp.ne.s32.totalorder %s168, %s169
      %p183 = scmp.eq.s32.totalorder %s24, 3
      %p184 = por %p182, %p183
      %p186 = scmp.ne.s32.totalorder %s169, %s185
      %p187 = scmp.eq.s32.totalorder %s24, 0
      %p188 = por %p186, %p187
      %p189 = scmp.le.s32.totalorder 1, %s18
      %p190 = scmp.lt.s32.totalorder %s18, 5
      %p191 = pnand %p189, %p190
      %p192 = pneg %p191
      // Predicated region
      $region9: #{tpu_custom_call.1} parent=5 // pred_check
        _
      $region10: #{tpu_custom_call.1} parent=5 // pred_check_branch
        %194 = sbr.rel (%p191) target = $region12
      $region11: #{tpu_custom_call.1} parent=5 // pred_region
        %s195 = ssub.s32 %s18, 1
        // Predicated region
        $region13: #{tpu_custom_call.1} parent=11 // pred_check
          %p196 = pneg %p77
        $region14: #{tpu_custom_call.1} parent=11 // pred_check_branch
          %198 = sbr.rel (%p196) target = $region16
        $region15: #{tpu_custom_call.1} parent=11 // pred_region
          %s200 = ssub.s32 256, 256
          %201 = vsyncadd [#allocation8], %s200
          %s203 = sshll.u32 [#allocation7], 4
          %s204 = int_to_ptr.vmem [resolvable:$true] %s203
          %206 = dma.hbm_to_vmem [thread:$0]  %s1, 256, %s204, [#allocation8]
        $region16: #{tpu_custom_call.1} parent=11 // pred_fallthru
          _
      $region12: #{tpu_custom_call.1} parent=5 // pred_fallthru
        _
      %p207 = scmp.lt.s32.totalorder %s18, 4
      // Predicated region
      $region17: #{tpu_custom_call.1} parent=5 // pred_check
        %p208 = pneg %p207
      $region18: #{tpu_custom_call.1} parent=5 // pred_check_branch
        %210 = sbr.rel (%p208) target = $region20
      $region19: #{tpu_custom_call.1} parent=5 // pred_region
        // Predicated region
        $region21: #{tpu_custom_call.1} parent=19 // pred_check
          %p211 = pneg %p50
        $region22: #{tpu_custom_call.1} parent=19 // pred_check_branch
          %213 = sbr.rel (%p211) target = $region24
        $region23: #{tpu_custom_call.1} parent=19 // pred_region
          %s214 = sand.u32 %s18, 1
          %s215 = scalar_lea.sflag [#allocation5], %s214
          %s216 = sand.u32 %s40, 1
          %s217 = smul.addr %s216, 16
          %s218 = scalar_lea.vmem [#allocation4], %s217
          %s220 = ssub.s32 256, 256
          %221 = vsyncadd %s215, %s220
          %s222 = smul.addr %s25, 2
          %s223 = smul.addr %s222, 128
          %s224 = scalar_lea.hbm %s0, %s223
          %s226 = sshll.u32 %s218, 4
          %s227 = int_to_ptr.vmem [resolvable:$true] %s226
          %229 = dma.hbm_to_vmem [thread:$0]  %s224, 256, %s227, %s215
        $region24: #{tpu_custom_call.1} parent=19 // pred_fallthru
          _
        // Predicated region
        $region25: #{tpu_custom_call.1} parent=19 // pred_check
          %p230 = pneg %p97
        $region26: #{tpu_custom_call.1} parent=19 // pred_check_branch
          %232 = sbr.rel (%p230) target = $region28
        $region27: #{tpu_custom_call.1} parent=19 // pred_region
          %p233 = scmp.lt.s32.totalorder %s26, 1
          %s234 = scalar_select %p233, %s26, 1
          %s235 = scalar_lea.vmem %s2, %s234
        $region28: #{tpu_custom_call.1} parent=19 // pred_fallthru
          _
        // Predicated region
        $region29: #{tpu_custom_call.1} parent=19 // pred_check
          %p236 = pneg %p123
        $region30: #{tpu_custom_call.1} parent=19 // pred_check_branch
          %238 = sbr.rel (%p236) target = $region32
        $region31: #{tpu_custom_call.1} parent=19 // pred_region
          %s239 = sand.u32 %s18, 1
          %s240 = scalar_lea.sflag [#allocation5], %s239
          %s241 = sand.u32 %s113, 1
          %s242 = smul.addr %s241, 128
          %s243 = scalar_lea.vmem [#allocation9], %s242
          %s245 = ssub.s32 2048, 2048
          %246 = vsyncadd %s240, %s245
          %s247 = smul.addr %s26, 64
          %s248 = scalar_lea.hbm %s3, %s247
          %s249 = sshll.u32 %s243, 4
          %s250 = int_to_ptr.vmem [resolvable:$true] %s249
          %255 = dma.hbm_to_vmem [thread:$0]  %s248, 2048, %s250, %s240, 128, 64, 4
        $region32: #{tpu_custom_call.1} parent=19 // pred_fallthru
          _
        // Predicated region
        $region33: #{tpu_custom_call.1} parent=19 // pred_check
          %p256 = pneg %p149
        $region34: #{tpu_custom_call.1} parent=19 // pred_check_branch
          %258 = sbr.rel (%p256) target = $region36
        $region35: #{tpu_custom_call.1} parent=19 // pred_region
          %s259 = sand.u32 %s18, 1
          %s260 = scalar_lea.sflag [#allocation5], %s259
          %s261 = sand.u32 %s139, 1
          %s262 = smul.addr %s261, 128
          %s263 = scalar_lea.vmem [#allocation10], %s262
          %s264 = smul.u32 16, %s26
          %s266 = ssub.s32 2048, 2048
          %267 = vsyncadd %s260, %s266
          %s268 = smul.addr %s264, 2
          %s269 = smul.addr %s268, 64
          %s270 = scalar_lea.hbm %s4, %s269
          %s271 = sshll.u32 %s263, 4
          %s272 = int_to_ptr.vmem [resolvable:$true] %s271
          %277 = dma.hbm_to_vmem [thread:$0]  %s270, 2048, %s272, %s260, 128, 128, 8
        $region36: #{tpu_custom_call.1} parent=19 // pred_fallthru
          _
      $region20: #{tpu_custom_call.1} parent=5 // pred_fallthru
        _
      %p278 = scmp.le.s32.totalorder 1, %s18
      %p279 = scmp.lt.s32.totalorder %s18, 5
      %p280 = pnand %p278, %p279
      %p281 = pneg %p280
      // Predicated region
      $region37: #{tpu_custom_call.1} parent=5 // pred_check
        _
      $region38: #{tpu_custom_call.1} parent=5 // pred_check_branch
        %283 = sbr.rel (%p280) target = $region40
      $region39: #{tpu_custom_call.1} parent=5 // pred_region
        %s284 = ssub.s32 %s18, 1
        %s285 = sand.u32 %s23, 1
        %s286 = scalar_lea.sflag [#allocation5], %s285
        %s287 = sand.u32 %s43, 1
        %s288 = smul.addr %s287, 16
        %s289 = scalar_lea.vmem [#allocation4], %s288
        // Predicated region
        $region41: #{tpu_custom_call.1} parent=39 // pred_check
          %p290 = pneg %p56
        $region42: #{tpu_custom_call.1} parent=39 // pred_check_branch
          %292 = sbr.rel (%p290) target = $region44
        $region43: #{tpu_custom_call.1} parent=39 // pred_region
          %293 = dma.done %s286, 256
        $region44: #{tpu_custom_call.1} parent=39 // pred_fallthru
          _
        // Predicated region
        $region45: #{tpu_custom_call.1} parent=39 // pred_check
          %p294 = pneg %p77
        $region46: #{tpu_custom_call.1} parent=39 // pred_check_branch
          %296 = sbr.rel (%p294) target = $region48
        $region47: #{tpu_custom_call.1} parent=39 // pred_region
          %297 = dma.done [#allocation8], 256
        $region48: #{tpu_custom_call.1} parent=39 // pred_fallthru
          _
        %s298 = sand.u32 %s23, 1
        %s299 = scalar_lea.sflag [#allocation5], %s298
        %s300 = sand.u32 %s116, 1
        %s301 = smul.addr %s300, 128
        %s302 = scalar_lea.vmem [#allocation9], %s301
        // Predicated region
        $region49: #{tpu_custom_call.1} parent=39 // pred_check
          %p303 = pneg %p129
        $region50: #{tpu_custom_call.1} parent=39 // pred_check_branch
          %305 = sbr.rel (%p303) target = $region52
        $region51: #{tpu_custom_call.1} parent=39 // pred_region
          %306 = dma.done %s299, 2048
        $region52: #{tpu_custom_call.1} parent=39 // pred_fallthru
          _
        %s307 = sand.u32 %s23, 1
        %s308 = scalar_lea.sflag [#allocation5], %s307
        %s309 = sand.u32 %s142, 1
        %s310 = smul.addr %s309, 128
        %s311 = scalar_lea.vmem [#allocation10], %s310
        // Predicated region
        $region53: #{tpu_custom_call.1} parent=39 // pred_check
          %p312 = pneg %p155
        $region54: #{tpu_custom_call.1} parent=39 // pred_check_branch
          %314 = sbr.rel (%p312) target = $region56
        $region55: #{tpu_custom_call.1} parent=39 // pred_region
          %315 = dma.done %s308, 2048
        $region56: #{tpu_custom_call.1} parent=39 // pred_fallthru
          _
        %s316 = sand.u32 %s23, 1
        %s317 = scalar_lea.sflag [#allocation5], %s316
        %s318 = sand.u32 %s43, 1
        %s319 = smul.addr %s318, 16
        %s320 = scalar_lea.vmem [#allocation4], %s319
        %p321 = pneg %p56
        %p322 = pneg %p53
        %p323 = pneg %p77
        %p324 = pneg %p74
        %p325 = scmp.lt.s32.totalorder %s28, 1
        %s326 = scalar_select %p325, %s28, 1
        %s327 = scalar_lea.vmem %s2, %s326
        %p328 = pneg %p103
        %p329 = pneg %p100
        %s330 = sand.u32 %s23, 1
        %s331 = scalar_lea.sflag [#allocation5], %s330
        %s332 = sand.u32 %s116, 1
        %s333 = smul.addr %s332, 128
        %s334 = scalar_lea.vmem [#allocation9], %s333
        %p335 = pneg %p129
        %p336 = pneg %p126
        %s337 = sand.u32 %s23, 1
        %s338 = scalar_lea.sflag [#allocation5], %s337
        %s339 = sand.u32 %s142, 1
        %s340 = smul.addr %s339, 128
        %s341 = scalar_lea.vmem [#allocation10], %s340
        %p342 = pneg %p155
        %p343 = pneg %p152
        %p344 = pneg %p181
        %p345 = pneg %p178
        %s346 = sand.u32 %s168, 1
        %s347 = scalar_lea.sflag [#allocation6], %s346
        %s348 = sand.u32 %s168, 1
        %s349 = smul.addr %s348, 16
        %s350 = scalar_lea.vmem [#allocation11], %s349
        %p351 = scmp.lt.s32.totalorder %s28, 1
        %s352 = scalar_select %p351, %s28, 1
        %s353 = scalar_lea.vmem %s2, %s352
        %s354 = smul.u32 16, %s28
        %p356 = scmp.eq.s32.totalorder %s28, 0
        // Predicated region
        $region57: #{tpu_custom_call.1} parent=39 // pred_check
          %p357 = pneg %p356
        $region58: #{tpu_custom_call.1} parent=39 // pred_check_branch
          %359 = sbr.rel (%p357) target = $region60
        $region59: #{tpu_custom_call.1} parent=39 // pred_region
          %v360 = vld [vmem:[%s289] sm:$0xff]
          %v361 = vld [vmem:[%s289 + $0x8] sm:$0xff]
          %v362 = vadd.f32 %v360, %v361
          %363 = vadd.xlane.f32.xlu0 %v362
          %v364 = vpop.xlane.xlu0 %363
          %v365 = vrcp.pop 256.0
          %v366 = vmul.f32 %v364, %v365
          %v367 = vmul.f32 %v360, %v360
          %v368 = vmul.f32 %v361, %v361
          %v369 = vadd.f32 %v367, %v368
          %370 = vadd.xlane.f32.xlu0 %v369
          %v371 = vpop.xlane.xlu0 %370
          %v372 = vmul.f32 %v371, %v365
          %v373 = vmul.f32 %v366, %v366
          %v374 = vsub.f32 %v372, %v373
          %v375 = vmax.f32 %v374, 0.0
          %v376 = vsub.f32 %v360, %v366
          %v377 = vsub.f32 %v361, %v366
          %v378 = vadd.f32 %v375, 1e-05
          %v379 = vrsqrt.pop %v378
          %v380 = vmul.f32 %v376, %v379
          %v381 = vmul.f32 %v377, %v379
          %v382 = vld [vmem:[#allocation7] ss:$8 sm:$0x3]
          %v384 = vlaneseq
          %v385 = vshrl.u32 %v384, 7
          %v386 = vsub.s32 0, %v385
          %v387 = vrot.slane %v382, %v386
          %v388 = vlaneseq
          %v389 = vshrl.u32 %v388, 7
          %v390 = vsub.s32 1, %v389
          %v391 = vrot.slane %v382, %v390
          %v394 = vmul.f32 %v380, %v387
          %v395 = vmul.f32 %v381, %v391
          %s396 = scalar_lea.vmem [#allocation7], 1
          %v397 = vld [vmem:[%s396] ss:$8 sm:$0x3]
          %v399 = vlaneseq
          %v400 = vshrl.u32 %v399, 7
          %v401 = vsub.s32 0, %v400
          %v402 = vrot.slane %v397, %v401
          %v403 = vlaneseq
          %v404 = vshrl.u32 %v403, 7
          %v405 = vsub.s32 1, %v404
          %v406 = vrot.slane %v397, %v405
          %v409 = vadd.f32 %v394, %v402
          %v410 = vadd.f32 %v395, %v406
          %411 = vst [vmem:[#allocation2] sm:$0xff] %v409
          %412 = vst [vmem:[#allocation2 + $0x8] sm:$0xff] %v410
          %413 = vst [vmem:[#allocation3] sm:$0xff] 0.0
          %414 = vst [vmem:[#allocation3 + $0x8] sm:$0xff] 0.0
        $region60: #{tpu_custom_call.1} parent=39 // pred_fallthru
          _
        %v415 = vld [vmem:[#allocation2] sm:$0xff]
        %v416 = vld [vmem:[#allocation2 + $0x8] sm:$0xff]
        %v417 = vpack.c.bf16 %v415, %v415
        %v418 = vpack.c.bf16 %v416, %v416
        %v419 = vld [vmem:[%s302] sm:$0xf]
        %v420 = vld [vmem:[%s302 + $0x4] sm:$0xf]
        %v421 = vld [vmem:[%s302 + $0x8] sm:$0xf]
        %v422 = vld [vmem:[%s302 + $0xc] sm:$0xf]
        %v423 = vld [vmem:[%s302 + $0x10] sm:$0xf]
        %v424 = vld [vmem:[%s302 + $0x14] sm:$0xf]
        %v425 = vld [vmem:[%s302 + $0x18] sm:$0xf]
        %v426 = vld [vmem:[%s302 + $0x1c] sm:$0xf]
        %v427 = vld [vmem:[%s302 + $0x20] sm:$0xf]
        %v428 = vld [vmem:[%s302 + $0x24] sm:$0xf]
        %v429 = vld [vmem:[%s302 + $0x28] sm:$0xf]
        %v430 = vld [vmem:[%s302 + $0x2c] sm:$0xf]
        %v431 = vld [vmem:[%s302 + $0x30] sm:$0xf]
        %v432 = vld [vmem:[%s302 + $0x34] sm:$0xf]
        %v433 = vld [vmem:[%s302 + $0x38] sm:$0xf]
        %v434 = vld [vmem:[%s302 + $0x3c] sm:$0xf]
        %v435 = vld [vmem:[%s302 + $0x40] sm:$0xf]
        %v436 = vld [vmem:[%s302 + $0x44] sm:$0xf]
        %v437 = vld [vmem:[%s302 + $0x48] sm:$0xf]
        %v438 = vld [vmem:[%s302 + $0x4c] sm:$0xf]
        %v439 = vld [vmem:[%s302 + $0x50] sm:$0xf]
        %v440 = vld [vmem:[%s302 + $0x54] sm:$0xf]
        %v441 = vld [vmem:[%s302 + $0x58] sm:$0xf]
        %v442 = vld [vmem:[%s302 + $0x5c] sm:$0xf]
        %v443 = vld [vmem:[%s302 + $0x60] sm:$0xf]
        %v444 = vld [vmem:[%s302 + $0x64] sm:$0xf]
        %v445 = vld [vmem:[%s302 + $0x68] sm:$0xf]
        %v446 = vld [vmem:[%s302 + $0x6c] sm:$0xf]
        %v447 = vld [vmem:[%s302 + $0x70] sm:$0xf]
        %v448 = vld [vmem:[%s302 + $0x74] sm:$0xf]
        %v449 = vld [vmem:[%s302 + $0x78] sm:$0xf]
        %v450 = vld [vmem:[%s302 + $0x7c] sm:$0xf]
        %v451 = vld [vmem:[%s353] sm:$0x1]
        %v453 = vlaneseq
        %v454 = vshrl.u32 %v453, 7
        %v455 = vsub.s32 0, %v454
        %v456 = vrot.slane %v451, %v455
        %v490 = vunpack.c.l.b16 %v419
        %v491 = vunpack.c.l.b16 %v420
        %v492 = vunpack.c.l.b16 %v421
        %v493 = vunpack.c.l.b16 %v422
        %v494 = vunpack.c.l.b16 %v423
        %v495 = vunpack.c.l.b16 %v424
        %v496 = vunpack.c.l.b16 %v425
        %v497 = vunpack.c.l.b16 %v426
        %v498 = vunpack.c.l.b16 %v427
        %v499 = vunpack.c.l.b16 %v428
        %v500 = vunpack.c.l.b16 %v429
        %v501 = vunpack.c.l.b16 %v430
        %v502 = vunpack.c.l.b16 %v431
        %v503 = vunpack.c.l.b16 %v432
        %v504 = vunpack.c.l.b16 %v433
        %v505 = vunpack.c.l.b16 %v434
        %v506 = vunpack.c.l.b16 %v435
        %v507 = vunpack.c.l.b16 %v436
        %v508 = vunpack.c.l.b16 %v437
        %v509 = vunpack.c.l.b16 %v438
        %v510 = vunpack.c.l.b16 %v439
        %v511 = vunpack.c.l.b16 %v440
        %v512 = vunpack.c.l.b16 %v441
        %v513 = vunpack.c.l.b16 %v442
        %v514 = vunpack.c.l.b16 %v443
        %v515 = vunpack.c.l.b16 %v444
        %v516 = vunpack.c.l.b16 %v445
        %v517 = vunpack.c.l.b16 %v446
        %v518 = vunpack.c.l.b16 %v447
        %v519 = vunpack.c.l.b16 %v448
        %v520 = vunpack.c.l.b16 %v449
        %v521 = vunpack.c.l.b16 %v450
        %v522 = vpack.c.b16 %v491, %v490
        %v523 = vpack.c.b16 %v493, %v492
        %v524 = vpack.c.b16 %v495, %v494
        %v525 = vpack.c.b16 %v497, %v496
        %v526 = vpack.c.b16 %v499, %v498
        %v527 = vpack.c.b16 %v501, %v500
        %v528 = vpack.c.b16 %v503, %v502
        %v529 = vpack.c.b16 %v505, %v504
        %v530 = vpack.c.b16 %v507, %v506
        %v531 = vpack.c.b16 %v509, %v508
        %v532 = vpack.c.b16 %v511, %v510
        %v533 = vpack.c.b16 %v513, %v512
        %v534 = vpack.c.b16 %v515, %v514
        %v535 = vpack.c.b16 %v517, %v516
        %v536 = vpack.c.b16 %v519, %v518
        %v537 = vpack.c.b16 %v521, %v520
        %554 = vmatprep.subr.bf16.mxu0 0
        %555 = vmatpush1.bf16.msra.mxu0 %v529
        %556 = vmatprep.subr.bf16.mxu0 0
        %557 = vmatpush1.bf16.msra.mxu0 %v528
        %558 = vmatprep.subr.bf16.mxu0 0
        %559 = vmatpush1.bf16.msra.mxu0 %v527
        %560 = vmatprep.subr.bf16.mxu0 0
        %561 = vmatpush1.bf16.msra.mxu0 %v526
        %562 = vmatprep.subr.bf16.mxu0 0
        %563 = vmatpush1.bf16.msra.mxu0 %v525
        %564 = vmatprep.subr.bf16.mxu0 0
        %565 = vmatpush1.bf16.msra.mxu0 %v524
        %566 = vmatprep.subr.bf16.mxu0 0
        %567 = vmatpush1.bf16.msra.mxu0 %v523
        %568 = vmatprep.subr.bf16.mxu0 0
        %569 = vmatpush1.bf16.msra.mxu0 %v522
        %570 = vmatprep.subr.bf16.mxu0 0
        %571 = vmatpush2.bf16.msra.mxu0 %v537
        %572 = vmatprep.subr.bf16.mxu0 0
        %573 = vmatpush2.bf16.msra.mxu0 %v536
        %574 = vmatprep.subr.bf16.mxu0 0
        %575 = vmatpush2.bf16.msra.mxu0 %v535
        %576 = vmatprep.subr.bf16.mxu0 0
        %577 = vmatpush2.bf16.msra.mxu0 %v534
        %578 = vmatprep.subr.bf16.mxu0 0
        %579 = vmatpush2.bf16.msra.mxu0 %v533
        %580 = vmatprep.subr.bf16.mxu0 0
        %581 = vmatpush2.bf16.msra.mxu0 %v532
        %582 = vmatprep.subr.bf16.mxu0 0
        %583 = vmatpush2.bf16.msra.mxu0 %v531
        %584 = vmatprep.subr.bf16.mxu0 0
        %585 = vmatpush2.bf16.msra.mxu0 %v530
        %586 = vmatprep.mubr.bf16.mxu0 %v418
        %587 = vmatmul.mubr.bf16.gmra.mxu0 %v417
        %v588 = vpop.f32.mrf.mxu0
        %v589 = vadd.f32 %v456, %v588
        %v590 = vpop.f32.mrf.mxu0
        %v591 = vpop.f32.mrf.mxu0
        %v592 = vpop.f32.mrf.mxu0
        %593 = vdwg.mxu0
        %v594 = vmul.f32 %v589, 0.5
        %v595 = vmul.f32 %v589, 0.70710677
        %v596 = verf.f32.pop %v595
        %v597 = vadd.f32 %v596, 1.0
        %v598 = vmul.f32 %v594, %v597
        %v599 = vld [vmem:[#allocation3] sm:$0xff]
        %v600 = vld [vmem:[#allocation3 + $0x8] sm:$0xff]
        %v601 = vpack.c.bf16 %v598, %v598
        %v602 = vld [vmem:[%s311] sm:$0xff]
        %v603 = vld [vmem:[%s311 + $0x8] sm:$0xff]
        %v604 = vld [vmem:[%s311 + $0x10] sm:$0xff]
        %v605 = vld [vmem:[%s311 + $0x18] sm:$0xff]
        %v606 = vld [vmem:[%s311 + $0x20] sm:$0xff]
        %v607 = vld [vmem:[%s311 + $0x28] sm:$0xff]
        %v608 = vld [vmem:[%s311 + $0x30] sm:$0xff]
        %v609 = vld [vmem:[%s311 + $0x38] sm:$0xff]
        %v610 = vld [vmem:[%s311 + $0x40] sm:$0xff]
        %v611 = vld [vmem:[%s311 + $0x48] sm:$0xff]
        %v612 = vld [vmem:[%s311 + $0x50] sm:$0xff]
        %v613 = vld [vmem:[%s311 + $0x58] sm:$0xff]
        %v614 = vld [vmem:[%s311 + $0x60] sm:$0xff]
        %v615 = vld [vmem:[%s311 + $0x68] sm:$0xff]
        %v616 = vld [vmem:[%s311 + $0x70] sm:$0xff]
        %v617 = vld [vmem:[%s311 + $0x78] sm:$0xff]
        %v634 = vunpack.c.l.b16 %v602
        %v635 = vunpack.c.h.b16 %v602
        %v636 = vunpack.c.l.b16 %v603
        %v637 = vunpack.c.h.b16 %v603
        %v638 = vunpack.c.l.b16 %v604
        %v639 = vunpack.c.h.b16 %v604
        %v640 = vunpack.c.l.b16 %v605
        %v641 = vunpack.c.h.b16 %v605
        %v642 = vunpack.c.l.b16 %v606
        %v643 = vunpack.c.h.b16 %v606
        %v644 = vunpack.c.l.b16 %v607
        %v645 = vunpack.c.h.b16 %v607
        %v646 = vunpack.c.l.b16 %v608
        %v647 = vunpack.c.h.b16 %v608
        %v648 = vunpack.c.l.b16 %v609
        %v649 = vunpack.c.h.b16 %v609
        %v650 = vunpack.c.l.b16 %v610
        %v651 = vunpack.c.h.b16 %v610
        %v652 = vunpack.c.l.b16 %v611
        %v653 = vunpack.c.h.b16 %v611
        %v654 = vunpack.c.l.b16 %v612
        %v655 = vunpack.c.h.b16 %v612
        %v656 = vunpack.c.l.b16 %v613
        %v657 = vunpack.c.h.b16 %v613
        %v658 = vunpack.c.l.b16 %v614
        %v659 = vunpack.c.h.b16 %v614
        %v660 = vunpack.c.l.b16 %v615
        %v661 = vunpack.c.h.b16 %v615
        %v662 = vunpack.c.l.b16 %v616
        %v663 = vunpack.c.h.b16 %v616
        %v664 = vunpack.c.l.b16 %v617
        %v665 = vunpack.c.h.b16 %v617
        %v666 = vpack.c.b16 %v636, %v634
        %v667 = vpack.c.b16 %v637, %v635
        %v668 = vpack.c.b16 %v640, %v638
        %v669 = vpack.c.b16 %v641, %v639
        %v670 = vpack.c.b16 %v644, %v642
        %v671 = vpack.c.b16 %v645, %v643
        %v672 = vpack.c.b16 %v648, %v646
        %v673 = vpack.c.b16 %v649, %v647
        %v674 = vpack.c.b16 %v652, %v650
        %v675 = vpack.c.b16 %v653, %v651
        %v676 = vpack.c.b16 %v656, %v654
        %v677 = vpack.c.b16 %v657, %v655
        %v678 = vpack.c.b16 %v660, %v658
        %v679 = vpack.c.b16 %v661, %v659
        %v680 = vpack.c.b16 %v664, %v662
        %v681 = vpack.c.b16 %v665, %v663
        %698 = vmatprep.subr.bf16.mxu0 %v681
        %699 = vmatpush1.bf16.msra.mxu0 %v680
        %700 = vmatprep.subr.bf16.mxu0 %v679
        %701 = vmatpush1.bf16.msra.mxu0 %v678
        %702 = vmatprep.subr.bf16.mxu0 %v677
        %703 = vmatpush1.bf16.msra.mxu0 %v676
        %704 = vmatprep.subr.bf16.mxu0 %v675
        %705 = vmatpush1.bf16.msra.mxu0 %v674
        %706 = vmatprep.subr.bf16.mxu0 %v673
        %707 = vmatpush1.bf16.msra.mxu0 %v672
        %708 = vmatprep.subr.bf16.mxu0 %v671
        %709 = vmatpush1.bf16.msra.mxu0 %v670
        %710 = vmatprep.subr.bf16.mxu0 %v669
        %711 = vmatpush1.bf16.msra.mxu0 %v668
        %712 = vmatprep.subr.bf16.mxu0 %v667
        %713 = vmatpush1.bf16.msra.mxu0 %v666
        %714 = vmatprep.subr.bf16.mxu0 0
        %715 = vmatpush2.bf16.msra.mxu0 0
        %716 = vmatprep.subr.bf16.mxu0 0
        %717 = vmatpush2.bf16.msra.mxu0 0
        %718 = vmatprep.subr.bf16.mxu0 0
        %719 = vmatpush2.bf16.msra.mxu0 0
        %720 = vmatprep.subr.bf16.mxu0 0
        %721 = vmatpush2.bf16.msra.mxu0 0
        %722 = vmatprep.subr.bf16.mxu0 0
        %723 = vmatpush2.bf16.msra.mxu0 0
        %724 = vmatprep.subr.bf16.mxu0 0
        %725 = vmatpush2.bf16.msra.mxu0 0
        %726 = vmatprep.subr.bf16.mxu0 0
        %727 = vmatpush2.bf16.msra.mxu0 0
        %728 = vmatprep.subr.bf16.mxu0 0
        %729 = vmatpush2.bf16.msra.mxu0 0
        %730 = vmatprep.mubr.bf16.mxu0 0
        %731 = vmatmul.mubr.bf16.gmra.mxu0 %v601
        %v732 = vpop.f32.mrf.mxu0
        %v733 = vadd.f32 0.0, %v732
        %v734 = vpop.f32.mrf.mxu0
        %v735 = vadd.f32 0.0, %v734
        %v736 = vpop.f32.mrf.mxu0
        %v737 = vpop.f32.mrf.mxu0
        %738 = vdwg.mxu0
        %v739 = vadd.f32 %v599, %v733
        %v740 = vadd.f32 %v600, %v735
        %741 = vst [vmem:[#allocation3] sm:$0xff] %v739
        %742 = vst [vmem:[#allocation3 + $0x8] sm:$0xff] %v740
        %p743 = scmp.eq.s32.totalorder %s28, 1
        // Predicated region
        $region61: #{tpu_custom_call.1} parent=39 // pred_check
          %p744 = pneg %p743
        $region62: #{tpu_custom_call.1} parent=39 // pred_check_branch
          %746 = sbr.rel (%p744) target = $region64
        $region63: #{tpu_custom_call.1} parent=39 // pred_region
          %v747 = vld [vmem:[#allocation2] sm:$0xff]
          %v748 = vld [vmem:[#allocation2 + $0x8] sm:$0xff]
          %v749 = vld [vmem:[#allocation3] sm:$0xff]
          %v750 = vld [vmem:[#allocation3 + $0x8] sm:$0xff]
          %v751 = vadd.f32 %v747, %v749
          %v752 = vadd.f32 %v748, %v750
          %s753 = scalar_lea.vmem [#allocation7], 2
          %v754 = vld [vmem:[%s753] ss:$8 sm:$0x3]
          %v756 = vlaneseq
          %v757 = vshrl.u32 %v756, 7
          %v758 = vsub.s32 0, %v757
          %v759 = vrot.slane %v754, %v758
          %v760 = vlaneseq
          %v761 = vshrl.u32 %v760, 7
          %v762 = vsub.s32 1, %v761
          %v763 = vrot.slane %v754, %v762
          %v766 = vadd.f32 %v751, %v759
          %v767 = vadd.f32 %v752, %v763
          %768 = vst [vmem:[%s350] sm:$0xff] %v766
          %769 = vst [vmem:[%s350 + $0x8] sm:$0xff] %v767
        $region64: #{tpu_custom_call.1} parent=39 // pred_fallthru
          _
        %s770 = sand.u32 %s168, 1
        %s771 = scalar_lea.sflag [#allocation6], %s770
        %s772 = sand.u32 %s168, 1
        %s773 = smul.addr %s772, 16
        %s774 = scalar_lea.vmem [#allocation11], %s773
        // Predicated region
        $region65: #{tpu_custom_call.1} parent=39 // pred_check
          %p775 = pneg %p178
        $region66: #{tpu_custom_call.1} parent=39 // pred_check_branch
          %777 = sbr.rel (%p775) target = $region68
        $region67: #{tpu_custom_call.1} parent=39 // pred_region
          %s779 = ssub.s32 256, 256
          %780 = vsyncadd %s771, %s779
          %s781 = smul.addr %s27, 2
          %s782 = smul.addr %s781, 128
          %s783 = scalar_lea.hbm %s5, %s782
          %s785 = sshll.u32 %s774, 4
          %s786 = int_to_ptr.vmem [resolvable:$true] %s785
          %788 = dma.vmem_to_hbm [thread:$0]  %s786, 256, %s783, %s771
        $region68: #{tpu_custom_call.1} parent=39 // pred_fallthru
          _
      $region40: #{tpu_custom_call.1} parent=5 // pred_fallthru
        _
      %p789 = scmp.le.s32.totalorder 2, %s18
      // Predicated region
      $region69: #{tpu_custom_call.1} parent=5 // pred_check
        %p790 = pneg %p789
      $region70: #{tpu_custom_call.1} parent=5 // pred_check_branch
        %792 = sbr.rel (%p790) target = $region72
      $region71: #{tpu_custom_call.1} parent=5 // pred_region
        %s793 = ssub.s32 %s18, 2
        // Predicated region
        $region73: #{tpu_custom_call.1} parent=71 // pred_check
          %p794 = pneg %p184
        $region74: #{tpu_custom_call.1} parent=71 // pred_check_branch
          %796 = sbr.rel (%p794) target = $region76
        $region75: #{tpu_custom_call.1} parent=71 // pred_region
          %s797 = sand.u32 %s169, 1
          %s798 = scalar_lea.sflag [#allocation6], %s797
          %s799 = sand.u32 %s169, 1
          %s800 = smul.addr %s799, 16
          %s801 = scalar_lea.vmem [#allocation11], %s800
          %802 = dma.done %s798, 256
        $region76: #{tpu_custom_call.1} parent=71 // pred_fallthru
          _
      $region72: #{tpu_custom_call.1} parent=5 // pred_fallthru
        _
    $region6: #{tpu_custom_call.1} parent=1 // loop_footer
      %s22 = sadd.s32 1, %s18
    $region7: #{tpu_custom_call.1} parent=1 // loop_footer_branch
      %17 = sbr.rel target = $region3
    $region8: #{tpu_custom_call.1} parent=1 // loop_exit
      _
    %803 = vsyncpa [#allocation5], 1
    %s804 = scalar_lea.sflag [#allocation5], 1
    %805 = vsyncpa %s804, 1
    %806 = vsyncpa [#allocation8], 1
    %807 = vsyncpa [#allocation6], 1
    %s808 = scalar_lea.sflag [#allocation6], 1
    %809 = vsyncpa %s808, 1

</llo_original>
